<compile_context>
chip_gen: v7x
topology: tpu7x:2x2x1
jax: 0.10.0
libtpu: 0.0.40
codegen_flags: <defaults>
</compile_context>

<pallas_src>
import functools
import math

import numpy as np

import jax
import jax.numpy as jnp
from jax.experimental import pallas as pl
from jax.experimental.pallas import tpu as pltpu


_LANES = 128
_MAX_PACK_LANES = 1024          # widest packed row before falling back to pow2-pad of D
_TARGET_TILE_BYTES = 4 << 20    # ~4 MiB of input per operand per grid step
# <= 1/2 of v7x's 64 MiB physical VMEM, == v6e 32 MiB scoped default, raises
# v5e's 16 MiB default.  Actual footprint (2 ops x 2 buffers x ~4 MiB + seg +
# accumulator scratch) is ~16-22 MiB, so there is ample Mosaic headroom.
_VMEM_LIMIT_BYTES = 32 << 20


def _cdiv(a: int, b: int) -> int:
    return -(-a // b)


def _round_up(x: int, m: int) -> int:
    return _cdiv(x, m) * m


def _next_pow2(x: int) -> int:
    return 1 << max(x - 1, 0).bit_length()


def _plan_blocks(rows: int, lane_width: int, itemsize: int, target_block_rows):
    """Pick (tile_rows, n_blocks, num_parallel, tiles_per_core)."""
    if target_block_rows is None:
        # Byte-derived tile: ~_TARGET_TILE_BYTES of input per operand per step.
        target = max(32, (_TARGET_TILE_BYTES // (itemsize * lane_width)) // 32 * 32)
    else:
        target = max(8, (int(target_block_rows) // 8) * 8)
    tile_rows = rows if rows <= target else target
    n_blocks = _cdiv(rows, tile_rows)
    if n_blocks == 1 and rows >= 64:
        # Split medium single-block inputs in two so v7x shards across both
        # TensorCores; on 1-TC chips (v5e/v6e) this costs one extra grid step.
        tile_rows = _round_up(_cdiv(rows, 2), 32)
        n_blocks = _cdiv(rows, tile_rows)
    # 1 parallel slice when there is a single block: avoids a fully-masked
    # duplicate tile (a redundant whole-array HBM read) on single-TC chips.
    num_par = 2 if n_blocks >= 2 else 1
    tpc = _cdiv(n_blocks, num_par)
    return tile_rows, n_blocks, num_par, tpc


# --------------------------- packed path (D <= 128) ---------------------------

def _mee_packed_kernel(yt_ref, yp_ref, seg_ref, out_ref, acc_ref, *,
                       tiles_per_core, tile_rows, valid_rows):
    c = pl.program_id(0)           # parallel slice (v7x TensorCore)
    i = pl.program_id(1)           # sequential row-tile index within the slice

    @pl.when(i == 0)
    def _():
        acc_ref[...] = jnp.zeros_like(acc_ref)

    diff = yp_ref[...].astype(jnp.float32) - yt_ref[...].astype(jnp.float32)
    sq = diff * diff
    # Per-sample segmented reduction over the D lanes of each packed sample on
    # the otherwise-idle MXU.  HIGHEST keeps full f32 accuracy and is free
    # because the kernel is HBM-bandwidth bound on every generation.
    ssum = jnp.dot(sq, seg_ref[...],
                   preferred_element_type=jnp.float32,
                   precision=jax.lax.Precision.HIGHEST)      # (tile_rows, spr)
    norms = jnp.sqrt(ssum)

    row_start = (c * tiles_per_core + i) * tile_rows
    fits = row_start + tile_rows <= valid_rows

    @pl.when(fits)
    def _():
        # Interior tile: no masking work on the hot path.
        acc_ref[...] += norms

    @pl.when(jnp.logical_not(fits))
    def _():
        # Partial edge block or duplicated (clamped) tile: rows past the real
        # data may hold stale VMEM garbage (possibly NaN/Inf after sqrt), but
        # jnp.where is a select so it cannot leak into valid rows.
        r = jax.lax.broadcasted_iota(jnp.int32, norms.shape, 0)
        acc_ref[...] += jnp.where(row_start + r < valid_rows, norms, 0.0)

    @pl.when(i == tiles_per_core - 1)
    def _():
        # Fused epilogue: reduce the resident accumulator once per slice and
        # emit a tiny (8, 128) block; only a 2-element sum + /N run in JAX.
        col = jnp.sum(acc_ref[...], axis=0, keepdims=True)    # (1, spr)
        tot = jnp.sum(col, axis=1, keepdims=True)             # (1, 1)
        out_ref[...] = jnp.broadcast_to(tot[None], out_ref.shape)


def _mee_packed(yt, yp, n, d, target_block_rows):
    g = math.gcd(d, _LANES)
    lanes = _LANES * d // g                  # lcm(d, 128): metadata-only packing
    d_pack = d
    if lanes > _MAX_PACK_LANES:
        # Awkward D (large odd part): pad features to the next power of two.
        # This is the only case that still materializes a padded copy.
        d_pack = _next_pow2(d)
        yt = jnp.pad(yt, ((0, 0), (0, d_pack - d)))
        yp = jnp.pad(yp, ((0, 0), (0, d_pack - d)))
        lanes = _LANES
    spr = lanes // d_pack                    # samples packed per lane-dense row
    total = n * d_pack
    rows = _cdiv(total, lanes)
    pad_elems = rows * lanes - total
    if pad_elems:
        # Single flat pad of the ragged tail only (phantom all-zero samples
        # contribute exactly 0 to the norm sum; divisor below stays true N).
        # Zero-copy whenever N*D is already a multiple of lcm(D, 128).
        yt_p = jnp.pad(yt.reshape(-1), (0, pad_elems)).reshape(rows, lanes)
        yp_p = jnp.pad(yp.reshape(-1), (0, pad_elems)).reshape(rows, lanes)
    else:
        yt_p = yt.reshape(rows, lanes)       # metadata-only reshape
        yp_p = yp.reshape(rows, lanes)

    tile_rows, n_blocks, num_par, tpc = _plan_blocks(
        rows, lanes, yt_p.dtype.itemsize, target_block_rows)
    max_block = n_blocks - 1

    # Block-diagonal 0/1 matrix: lane l belongs to packed sample l // d_pack.
    # Constant index_map => fetched once per core, never re-DMA'd per step.
    seg = jnp.asarray(
        (np.arange(lanes)[:, None] // d_pack) == np.arange(spr)[None, :],
        dtype=jnp.float32)

    kernel = functools.partial(
        _mee_packed_kernel,
        tiles_per_core=tpc, tile_rows=tile_rows, valid_rows=rows)

    def row_map(c, i):
        # Duplicated tiles (from rounding n_blocks up to num_par) re-read the
        # last real block and are fully masked inside the kernel.
        return (jnp.minimum(c * tpc + i, max_block), 0)

    out = pl.pallas_call(
        kernel,
        out_shape=jax.ShapeDtypeStruct((num_par, 8, _LANES), jnp.float32),
        grid_spec=pltpu.PrefetchScalarGridSpec(
            num_scalar_prefetch=0,
            grid=(num_par, tpc),
            in_specs=[
                pl.BlockSpec((tile_rows, lanes), row_map),
                pl.BlockSpec((tile_rows, lanes), row_map),
                pl.BlockSpec((lanes, spr), lambda c, i: (0, 0)),
            ],
            out_specs=pl.BlockSpec((1, 8, _LANES), lambda c, i: (c, 0, 0)),
            scratch_shapes=[pltpu.VMEM((tile_rows, spr), jnp.float32)],
        ),
        compiler_params=pltpu.CompilerParams(
            dimension_semantics=("parallel", "arbitrary"),
            vmem_limit_bytes=_VMEM_LIMIT_BYTES,
        ),
    )(yt_p, yp_p, seg)

    # Tiny final reduction (num_par elements) + mean in plain JAX (true N).
    return jnp.sum(out[:, 0, 0]) / n


# ---------------------------- wide path (D > 128) -----------------------------

def _mee_wide_kernel(yt_ref, yp_ref, out_ref, acc_ref, *,
                     tiles_per_core, tile_rows, valid_rows):
    c = pl.program_id(0)
    i = pl.program_id(1)

    @pl.when(i == 0)
    def _():
        acc_ref[...] = jnp.zeros_like(acc_ref)

    diff = yp_ref[...].astype(jnp.float32) - yt_ref[...].astype(jnp.float32)
    norms = jnp.sqrt(jnp.sum(diff * diff, axis=-1, keepdims=True))  # (tile_rows, 1)

    row_start = (c * tiles_per_core + i) * tile_rows
    fits = row_start + tile_rows <= valid_rows

    @pl.when(fits)
    def _():
        acc_ref[...] += norms

    @pl.when(jnp.logical_not(fits))
    def _():
        r = jax.lax.broadcasted_iota(jnp.int32, norms.shape, 0)
        acc_ref[...] += jnp.where(row_start + r < valid_rows, norms, 0.0)

    @pl.when(i == tiles_per_core - 1)
    def _():
        tot = jnp.sum(acc_ref[...], axis=0, keepdims=True)    # (1, 1)
        out_ref[...] = jnp.broadcast_to(tot[None], out_ref.shape)


def _mee_wide(yt, yp, n, d, target_block_rows):
    tile_rows, n_blocks, num_par, tpc = _plan_blocks(
        n, d, yt.dtype.itemsize, target_block_rows)
    max_block = n_blocks - 1

    kernel = functools.partial(
        _mee_wide_kernel,
        tiles_per_core=tpc, tile_rows=tile_rows, valid_rows=n)

    def row_map(c, i):
        return (jnp.minimum(c * tpc + i, max_block), 0)

    out = pl.pallas_call(
        kernel,
        out_shape=jax.ShapeDtypeStruct((num_par, 8, _LANES), jnp.float32),
        grid_spec=pltpu.PrefetchScalarGridSpec(
            num_scalar_prefetch=0,
            grid=(num_par, tpc),
            in_specs=[
                pl.BlockSpec((tile_rows, d), row_map),
                pl.BlockSpec((tile_rows, d), row_map),
            ],
            out_specs=pl.BlockSpec((1, 8, _LANES), lambda c, i: (c, 0, 0)),
            scratch_shapes=[pltpu.VMEM((tile_rows, 1), jnp.float32)],
        ),
        compiler_params=pltpu.CompilerParams(
            dimension_semantics=("parallel", "arbitrary"),
            vmem_limit_bytes=_VMEM_LIMIT_BYTES,
        ),
    )(yt, yp)

    return jnp.sum(out[:, 0, 0]) / n


# --------------------------------- wrapper -----------------------------------

def mee_loss(y_true: jax.Array, y_pred: jax.Array, *,
             target_block_rows: int | None = None) -> jax.Array:
    """Pallas TPU MEELoss: mean over samples of ||y_pred - y_true||_2 (dim=-1)."""
    assert y_true.shape == y_pred.shape, "y_true / y_pred must have equal shapes"
    assert y_true.ndim >= 2, "expected (..., features)"
    *batch, d = y_true.shape
    n = math.prod(batch)
    assert n > 0 and d > 0
    yt = y_true.reshape(n, d)
    yp = y_pred.reshape(n, d)
    if d <= _LANES:
        return _mee_packed(yt, yp, n, d, target_block_rows)
    return _mee_wide(yt, yp, n, d, target_block_rows)


def mee_loss_ref(y_true, y_pred):
    """Pure-JAX reference: torch.mean(torch.norm(y_pred - y_true, dim=-1))."""
    return jnp.mean(jnp.linalg.norm(y_pred - y_true, axis=-1))


if __name__ == "__main__":
    key = jax.random.PRNGKey(0)
    ks = jax.random.split(key, 8)

    # 1) ML-cup style regression head: 16 samples, 4 target dimensions
    #    (single tiny block, flat-padded ragged tail).
    y_true = jax.random.normal(ks[0], (16, 4), dtype=jnp.float32)
    y_pred = jax.random.normal(ks[1], (16, 4), dtype=jnp.float32)
    loss = jax.block_until_ready(mee_loss(y_true, y_pred))
    ref = jax.block_until_ready(mee_loss_ref(y_true, y_pred))
    assert jnp.allclose(loss, ref, rtol=1e-4, atol=1e-5), (loss, ref)

    # 2) Odd feature dim (D=3) + ragged N: lcm(3,128)=384-lane packing, ragged
    #    flat pad, multi-step accumulator, duplicate-tile masking, both slices.
    yt2 = jax.random.normal(ks[2], (3000, 3), dtype=jnp.float32)
    yp2 = jax.random.normal(ks[3], (3000, 3), dtype=jnp.float32)
    loss2 = jax.block_until_ready(mee_loss(yt2, yp2, target_block_rows=8))
    ref2 = jax.block_until_ready(mee_loss_ref(yt2, yp2))
    assert jnp.allclose(loss2, ref2, rtol=1e-4, atol=1e-5), (loss2, ref2)

    # 3) Wide-feature fallback path (D > 128), multi-block + masked duplicate.
    yt3 = jax.random.normal(ks[4], (96, 160), dtype=jnp.float32)
    yp3 = jax.random.normal(ks[5], (96, 160), dtype=jnp.float32)
    loss3 = jax.block_until_ready(mee_loss(yt3, yp3, target_block_rows=32))
    ref3 = jax.block_until_ready(mee_loss_ref(yt3, yp3))
    assert jnp.allclose(loss3, ref3, rtol=1e-4, atol=1e-5), (loss3, ref3)

    # 4) Aligned, zero-copy packing with the default byte-derived tile
    #    (exercises the split-into-two-blocks path used for megacore sharding).
    yt4 = jax.random.normal(ks[6], (4096, 4), dtype=jnp.float32)
    yp4 = jax.random.normal(ks[7], (4096, 4), dtype=jnp.float32)
    loss4 = jax.block_until_ready(mee_loss(yt4, yp4))
    ref4 = jax.block_until_ready(mee_loss_ref(yt4, yp4))
    assert jnp.allclose(loss4, ref4, rtol=1e-4, atol=1e-5), (loss4, ref4)

    print("KERNEL_OK")
</pallas_src>

<mosaic_0001>
module attributes {stable_mosaic.version = 11 : i64} {
  func.func @_mee_packed_kernel(%arg0: i32, %arg1: i32, %arg2: memref<1x128xf32, #tpu.memory_space<vmem>>, %arg3: memref<1x128xf32, #tpu.memory_space<vmem>>, %arg4: memref<128x32xf32, #tpu.memory_space<vmem>>, %arg5: memref<1x8x128xf32, #tpu.memory_space<vmem>>, %arg6: memref<1x32xf32, #tpu.memory_space<vmem>>) attributes {dimension_semantics = [#tpu.dimension_semantics<parallel>, #tpu.dimension_semantics<arbitrary>], iteration_bounds = array<i64: 1, 1>, scalar_prefetch = 0 : i64, scratch_operands = 1 : i64, tpu.core_type = #tpu.core_type<tc>, window_params = [{transform_indices = @transform_0, window_bounds = array<i64: 1, 128>}, {transform_indices = @transform_1, window_bounds = array<i64: 1, 128>}, {pipeline_mode = #tpu.pipeline_mode<synchronous>, transform_indices = @transform_2, window_bounds = array<i64: 128, 32>}, {transform_indices = @transform_3, window_bounds = array<i64: 1, 8, 128>}]} {
    %c0_i32 = arith.constant 0 : i32
    %0 = arith.cmpi eq, %arg1, %c0_i32 : i32
    %1 = arith.extui %0 : i1 to i32
    %c0_i32_0 = arith.constant 0 : i32
    %2 = arith.cmpi ne, %1, %c0_i32_0 : i32
    scf.if %2 {
      %cst_13 = arith.constant 0.000000e+00 : f32
      %23 = vector.broadcast %cst_13 : f32 to vector<1x32xf32>
      %c0_14 = arith.constant 0 : index
      %c0_15 = arith.constant 0 : index
      %24 = vector.load %arg6[%c0_14, %c0_15] : memref<1x32xf32, #tpu.memory_space<vmem>>, vector<1x32xf32>
      tpu.vector_store %arg6[%c0_14, %c0_15], %23 {strides = array<i32>} : memref<1x32xf32, #tpu.memory_space<vmem>>, vector<1x32xf32>,
    } else {
    }
    %c0 = arith.constant 0 : index
    %c0_1 = arith.constant 0 : index
    %3 = vector.load %arg3[%c0, %c0_1] : memref<1x128xf32, #tpu.memory_space<vmem>>, vector<1x128xf32>
    %c0_2 = arith.constant 0 : index
    %c0_3 = arith.constant 0 : index
    %4 = vector.load %arg2[%c0_2, %c0_3] : memref<1x128xf32, #tpu.memory_space<vmem>>, vector<1x128xf32>
    %5 = arith.subf %3, %4 : vector<1x128xf32>
    %6 = arith.mulf %5, %5 : vector<1x128xf32>
    %c0_4 = arith.constant 0 : index
    %c0_5 = arith.constant 0 : index
    %7 = vector.load %arg4[%c0_4, %c0_5] : memref<128x32xf32, #tpu.memory_space<vmem>>, vector<128x32xf32>
    %cst = arith.constant dense<0.000000e+00> : vector<1x32xf32>
    %8 = tpu.matmul %6, %7, %cst {dimension_numbers = #tpu.dot_dimension_numbers<[1], [0], [0], [1], [0, 0, 1, 1], [], []>, precision = #tpu.contract_precision<fp32>} : vector<1x128xf32>, vector<128x32xf32>, vector<1x32xf32> -> vector<1x32xf32>
    %9 = math.sqrt %8 : vector<1x32xf32>
    %c1_i32 = arith.constant 1 : i32
    %10 = arith.muli %arg0, %c1_i32 : i32
    %11 = arith.addi %10, %arg1 : i32
    %c1_i32_6 = arith.constant 1 : i32
    %12 = arith.muli %11, %c1_i32_6 : i32
    %c1_i32_7 = arith.constant 1 : i32
    %13 = arith.addi %12, %c1_i32_7 : i32
    %c1_i32_8 = arith.constant 1 : i32
    %14 = arith.cmpi sle, %13, %c1_i32_8 : i32
    %15 = arith.extui %14 : i1 to i32
    %c0_i32_9 = arith.constant 0 : i32
    %16 = arith.cmpi ne, %15, %c0_i32_9 : i32
    scf.if %16 {
      %c0_13 = arith.constant 0 : index
      %c0_14 = arith.constant 0 : index
      %23 = vector.load %arg6[%c0_13, %c0_14] : memref<1x32xf32, #tpu.memory_space<vmem>>, vector<1x32xf32>
      %24 = arith.addf %23, %9 : vector<1x32xf32>
      %c0_15 = arith.constant 0 : index
      %c0_16 = arith.constant 0 : index
      %25 = vector.load %arg6[%c0_15, %c0_16] : memref<1x32xf32, #tpu.memory_space<vmem>>, vector<1x32xf32>
      tpu.vector_store %arg6[%c0_15, %c0_16], %24 {strides = array<i32>} : memref<1x32xf32, #tpu.memory_space<vmem>>, vector<1x32xf32>,
    } else {
    }
    %true = arith.constant true
    %17 = arith.xori %14, %true : i1
    %18 = arith.extui %17 : i1 to i32
    %c0_i32_10 = arith.constant 0 : i32
    %19 = arith.cmpi ne, %18, %c0_i32_10 : i32
    scf.if %19 {
      %23 = tpu.iota {dimensions = array<i32: 0>} : vector<1x32xi32>
      %c0_13 = arith.constant 0 : index
      %c0_14 = arith.constant 0 : index
      %24 = vector.load %arg6[%c0_13, %c0_14] : memref<1x32xf32, #tpu.memory_space<vmem>>, vector<1x32xf32>
      %25 = vector.broadcast %12 : i32 to vector<1x32xi32>
      %26 = arith.addi %25, %23 : vector<1x32xi32>
      %c1_i32_15 = arith.constant 1 : i32
      %27 = vector.broadcast %c1_i32_15 : i32 to vector<1x32xi32>
      %28 = arith.cmpi slt, %26, %27 : vector<1x32xi32>
      %cst_16 = arith.constant 0.000000e+00 : f32
      %29 = vector.broadcast %cst_16 : f32 to vector<1x32xf32>
      %30 = arith.select %28, %9, %29 : vector<1x32xi1>, vector<1x32xf32>
      %31 = arith.addf %24, %30 : vector<1x32xf32>
      %c0_17 = arith.constant 0 : index
      %c0_18 = arith.constant 0 : index
      %32 = vector.load %arg6[%c0_17, %c0_18] : memref<1x32xf32, #tpu.memory_space<vmem>>, vector<1x32xf32>
      tpu.vector_store %arg6[%c0_17, %c0_18], %31 {strides = array<i32>} : memref<1x32xf32, #tpu.memory_space<vmem>>, vector<1x32xf32>,
    } else {
    }
    %c0_i32_11 = arith.constant 0 : i32
    %20 = arith.cmpi eq, %arg1, %c0_i32_11 : i32
    %21 = arith.extui %20 : i1 to i32
    %c0_i32_12 = arith.constant 0 : i32
    %22 = arith.cmpi ne, %21, %c0_i32_12 : i32
    scf.if %22 {
      %c0_13 = arith.constant 0 : index
      %c0_14 = arith.constant 0 : index
      %23 = vector.load %arg6[%c0_13, %c0_14] : memref<1x32xf32, #tpu.memory_space<vmem>>, vector<1x32xf32>
      %cst_15 = arith.constant dense<0.000000e+00> : vector<32xf32>
      %24 = vector.multi_reduction <add>, %23, %cst_15 [0] : vector<1x32xf32> to vector<32xf32>
      %25 = vector.shape_cast %24 : vector<32xf32> to vector<1x32xf32>
      %cst_16 = arith.constant dense<0.000000e+00> : vector<1xf32>
      %26 = vector.multi_reduction <add>, %25, %cst_16 [1] : vector<1x32xf32> to vector<1xf32>
      %27 = vector.shape_cast %26 : vector<1xf32> to vector<1x1xf32>
      %28 = vector.shape_cast %27 : vector<1x1xf32> to vector<1x1x1xf32>
      %29 = vector.shape_cast %28 : vector<1x1x1xf32> to vector<1x1x1xf32>
      %30 = vector.broadcast %29 : vector<1x1x1xf32> to vector<1x8x128xf32>
      %c0_17 = arith.constant 0 : index
      %c0_18 = arith.constant 0 : index
      %c0_19 = arith.constant 0 : index
      %31 = vector.load %arg5[%c0_17, %c0_18, %c0_19] : memref<1x8x128xf32, #tpu.memory_space<vmem>>, vector<1x8x128xf32>
      tpu.vector_store %arg5[%c0_17, %c0_18, %c0_19], %30 {strides = array<i32>} : memref<1x8x128xf32, #tpu.memory_space<vmem>>, vector<1x8x128xf32>,
    } else {
    }
    return
  }
  func.func @transform_0(%arg0: i32, %arg1: i32) -> (i32, i32) {
    %c1_i32 = arith.constant 1 : i32
    %0 = arith.muli %arg0, %c1_i32 : i32
    %1 = arith.addi %0, %arg1 : i32
    %c0_i32 = arith.constant 0 : i32
    %2 = arith.minsi %1, %c0_i32 : i32
    %c0_i32_0 = arith.constant 0 : i32
    %c0_i32_1 = arith.constant 0 : i32
    return %2, %c0_i32_0 : i32, i32
  }
  func.func @transform_1(%arg0: i32, %arg1: i32) -> (i32, i32) {
    %c1_i32 = arith.constant 1 : i32
    %0 = arith.muli %arg0, %c1_i32 : i32
    %1 = arith.addi %0, %arg1 : i32
    %c0_i32 = arith.constant 0 : i32
    %2 = arith.minsi %1, %c0_i32 : i32
    %c0_i32_0 = arith.constant 0 : i32
    %c0_i32_1 = arith.constant 0 : i32
    return %2, %c0_i32_0 : i32, i32
  }
  func.func @transform_2(%arg0: i32, %arg1: i32) -> (i32, i32) {
    %c0_i32 = arith.constant 0 : i32
    %c0_i32_0 = arith.constant 0 : i32
    %c0_i32_1 = arith.constant 0 : i32
    return %c0_i32, %c0_i32_0 : i32, i32
  }
  func.func @transform_3(%arg0: i32, %arg1: i32) -> (i32, i32, i32) {
    %c0_i32 = arith.constant 0 : i32
    %c0_i32_0 = arith.constant 0 : i32
    %c0_i32_1 = arith.constant 0 : i32
    return %arg0, %c0_i32, %c0_i32_0 : i32, i32, i32
  }
}

</mosaic_0001>

<llo_original>
// kernel: tpu_custom_call.1
$region0: #{tpu_custom_call.1}
  #allocation0 [shape = 'u32[]', space=smem, size = 0x4, offset = 0x4, fixed_abs, tag = 'smem constant byte address 0x4 - core index']
  #allocation1 [shape = 'u32[144,128]{1,0:T(1,128)}', space=vmem, size = 0x12000, scoped, tag = 'internal scratch']
  #allocation2 [shape = 'f32[1,32]{1,0:T(1,128)}', space=vmem, size = 0x200, scoped, tag = 'scratch operand']
  %s0 = inlined_call_operand.vmem [shape: f32[1,128], index: 0, kind: input, shape index: {}]
  %s1 = inlined_call_operand.vmem [shape: f32[1,128], index: 1, kind: input, shape index: {}]
  %s2 = inlined_call_operand.vmem [shape: f32[128,32], index: 2, kind: input, shape index: {}]
  %s3 = inlined_call_operand.hbm [shape: f32[1,8,128], index: 3, kind: output, shape index: {}]
  %s4 = sld [smem:[#allocation0]]
  $region38: #{tpu_custom_call.1} parent=0
    _
  %s6 = ssub.s32 1, %s4
  %s7 = scalar_select 0, %s6, %s4
  $region1: #{tpu_custom_call.1} parent=0
    #allocation3 [shape = 'u8[4096]{0}', space=vmem, size = 0x1000, scoped, tag = 'output window, operand 0, single buffered']
    #allocation4 [shape = 's32[1]{0}', space=sflag, size = 0x4, scoped, tag = 'scoped memory for tpu_custom_call.1']
    %8 = vsyncpa [#allocation4], 0
    // Predicated region
    $region2: #{tpu_custom_call.1} parent=1 // pred_check
      _
    $region3: #{tpu_custom_call.1} parent=1 // pred_check_branch
      %10 = sbr.rel (0) target = $region5
    $region4: #{tpu_custom_call.1} parent=1 // pred_region
      %s11 = sadd.s32 0, 0
      %p12 = scmp.lt.s32.totalorder %s11, 0
      %s13 = scalar_select %p12, %s11, 0
      %p14 = scmp.lt.s32.totalorder %s13, 0
      %s15 = scalar_select %p14, %s13, 0
      %s16 = scalar_lea.vmem %s0, %s15
      %s17 = sadd.s32 0, 0
      %p18 = scmp.lt.s32.totalorder %s17, 0
      %s19 = scalar_select %p18, %s17, 0
    $region5: #{tpu_custom_call.1} parent=1 // pred_fallthru
      _
    // Predicated region
    $region6: #{tpu_custom_call.1} parent=1 // pred_check
      _
    $region7: #{tpu_custom_call.1} parent=1 // pred_check_branch
      %21 = sbr.rel (0) target = $region9
    $region8: #{tpu_custom_call.1} parent=1 // pred_region
      %s22 = sadd.s32 0, 0
      %p23 = scmp.lt.s32.totalorder %s22, 0
      %s24 = scalar_select %p23, %s22, 0
      %p25 = scmp.lt.s32.totalorder %s24, 0
      %s26 = scalar_select %p25, %s24, 0
      %s27 = scalar_lea.vmem %s1, %s26
      %s28 = sadd.s32 0, 0
      %p29 = scmp.lt.s32.totalorder %s28, 0
      %s30 = scalar_select %p29, %s28, 0
    $region9: #{tpu_custom_call.1} parent=1 // pred_fallthru
      _
    // Predicated region
    $region10: #{tpu_custom_call.1} parent=1 // pred_check
      _
    $region11: #{tpu_custom_call.1} parent=1 // pred_check_branch
      %32 = sbr.rel (0) target = $region13
    $region12: #{tpu_custom_call.1} parent=1 // pred_region
      _
    $region13: #{tpu_custom_call.1} parent=1 // pred_fallthru
      _
    %s33 = sadd.s32 0, 0
    %p34 = scmp.lt.s32.totalorder %s33, 0
    %s35 = scalar_select %p34, %s33, 0
    %p36 = scmp.lt.s32.totalorder %s35, 0
    %s37 = scalar_select %p36, %s35, 0
    %s38 = scalar_lea.vmem %s0, %s37
    %s39 = sadd.s32 0, 0
    %p40 = scmp.lt.s32.totalorder %s39, 0
    %s41 = scalar_select %p40, %s39, 0
    %p42 = scmp.lt.s32.totalorder %s41, 0
    %s43 = scalar_select %p42, %s41, 0
    %s44 = scalar_lea.vmem %s1, %s43
    %s45 = sadd.s32 0, 0
    %p46 = scmp.lt.s32.totalorder %s45, 0
    %s47 = scalar_select %p46, %s45, 0
    %p48 = scmp.lt.s32.totalorder %s47, 0
    %s49 = scalar_select %p48, %s47, 0
    %s50 = scalar_lea.vmem %s0, %s49
    %s51 = sadd.s32 0, 0
    %p52 = scmp.lt.s32.totalorder %s51, 0
    %s53 = scalar_select %p52, %s51, 0
    %s54 = sadd.s32 0, 0
    %p55 = scmp.lt.s32.totalorder %s54, 0
    %s56 = scalar_select %p55, %s54, 0
    %p57 = scmp.lt.s32.totalorder %s56, 0
    %s58 = scalar_select %p57, %s56, 0
    %s59 = scalar_lea.vmem %s1, %s58
    %s60 = sadd.s32 0, 0
    %p61 = scmp.lt.s32.totalorder %s60, 0
    %s62 = scalar_select %p61, %s60, 0
    %p63 = scmp.eq.s32.totalorder 0, 0
    // Predicated region
    $region14: #{tpu_custom_call.1} parent=1 // pred_check
      %p64 = pneg %p63
    $region15: #{tpu_custom_call.1} parent=1 // pred_check_branch
      %66 = sbr.rel (%p64) target = $region17
    $region16: #{tpu_custom_call.1} parent=1 // pred_region
      %vm67 = vcmask 253952
      %68 = vst.msk [vmem:[#allocation2] sm:$0x1] %vm67, 0.0
    $region17: #{tpu_custom_call.1} parent=1 // pred_fallthru
      _
    %v69 = vld [vmem:[%s59] sm:$0x1]
    %v70 = vld [vmem:[%s50] sm:$0x1]
    %v71 = vsub.f32 %v69, %v70
    %v72 = vmul.f32 %v71, %v71
    %v73 = vld [vmem:[%s2] sm:$0xff]
    %v74 = vld [vmem:[%s2 + $0x8] sm:$0xff]
    %v75 = vld [vmem:[%s2 + $0x10] sm:$0xff]
    %v76 = vld [vmem:[%s2 + $0x18] sm:$0xff]
    %v77 = vld [vmem:[%s2 + $0x20] sm:$0xff]
    %v78 = vld [vmem:[%s2 + $0x28] sm:$0xff]
    %v79 = vld [vmem:[%s2 + $0x30] sm:$0xff]
    %v80 = vld [vmem:[%s2 + $0x38] sm:$0xff]
    %v81 = vld [vmem:[%s2 + $0x40] sm:$0xff]
    %v82 = vld [vmem:[%s2 + $0x48] sm:$0xff]
    %v83 = vld [vmem:[%s2 + $0x50] sm:$0xff]
    %v84 = vld [vmem:[%s2 + $0x58] sm:$0xff]
    %v85 = vld [vmem:[%s2 + $0x60] sm:$0xff]
    %v86 = vld [vmem:[%s2 + $0x68] sm:$0xff]
    %v87 = vld [vmem:[%s2 + $0x70] sm:$0xff]
    %v88 = vld [vmem:[%s2 + $0x78] sm:$0xff]
    %89 = vmatprep.subr.mxu0 0.0
    %v90 = vand.u32 %v73, 4294901760
    %91 = vmatpush1.msra.mxu0 %v90
    %92 = vmatprep.subr.mxu0 0.0
    %v93 = vand.u32 %v74, 4294901760
    %94 = vmatpush1.msra.mxu0 %v93
    %95 = vmatprep.subr.mxu0 0.0
    %v96 = vand.u32 %v75, 4294901760
    %97 = vmatpush1.msra.mxu0 %v96
    %98 = vmatprep.subr.mxu0 0.0
    %v99 = vand.u32 %v76, 4294901760
    %100 = vmatpush1.msra.mxu0 %v99
    %101 = vmatprep.subr.mxu0 0.0
    %v102 = vand.u32 %v77, 4294901760
    %103 = vmatpush1.msra.mxu0 %v102
    %104 = vmatprep.subr.mxu0 0.0
    %v105 = vand.u32 %v78, 4294901760
    %106 = vmatpush1.msra.mxu0 %v105
    %107 = vmatprep.subr.mxu0 0.0
    %v108 = vand.u32 %v79, 4294901760
    %109 = vmatpush1.msra.mxu0 %v108
    %110 = vmatprep.subr.mxu0 0.0
    %v111 = vand.u32 %v80, 4294901760
    %112 = vmatpush1.msra.mxu0 %v111
    %113 = vmatprep.subr.mxu0 0.0
    %v114 = vand.u32 %v81, 4294901760
    %115 = vmatpush1.msra.mxu0 %v114
    %116 = vmatprep.subr.mxu0 0.0
    %v117 = vand.u32 %v82, 4294901760
    %118 = vmatpush1.msra.mxu0 %v117
    %119 = vmatprep.subr.mxu0 0.0
    %v120 = vand.u32 %v83, 4294901760
    %121 = vmatpush1.msra.mxu0 %v120
    %122 = vmatprep.subr.mxu0 0.0
    %v123 = vand.u32 %v84, 4294901760
    %124 = vmatpush1.msra.mxu0 %v123
    %125 = vmatprep.subr.mxu0 0.0
    %v126 = vand.u32 %v85, 4294901760
    %127 = vmatpush1.msra.mxu0 %v126
    %128 = vmatprep.subr.mxu0 0.0
    %v129 = vand.u32 %v86, 4294901760
    %130 = vmatpush1.msra.mxu0 %v129
    %131 = vmatprep.subr.mxu0 0.0
    %v132 = vand.u32 %v87, 4294901760
    %133 = vmatpush1.msra.mxu0 %v132
    %134 = vmatprep.subr.mxu0 0.0
    %v135 = vand.u32 %v88, 4294901760
    %136 = vmatpush1.msra.mxu0 %v135
    %137 = vmatprep.subr.mxu0 0.0
    %138 = vmatpush1.msra.mxu0 0.0
    %139 = vmatprep.subr.mxu0 0.0
    %140 = vmatpush1.msra.mxu0 0.0
    %141 = vmatprep.subr.mxu0 0.0
    %142 = vmatpush1.msra.mxu0 0.0
    %143 = vmatprep.subr.mxu0 0.0
    %144 = vmatpush1.msra.mxu0 0.0
    %145 = vmatprep.subr.mxu0 0.0
    %146 = vmatpush1.msra.mxu0 0.0
    %147 = vmatprep.subr.mxu0 0.0
    %148 = vmatpush1.msra.mxu0 0.0
    %149 = vmatprep.subr.mxu0 0.0
    %150 = vmatpush1.msra.mxu0 0.0
    %151 = vmatprep.subr.mxu0 0.0
    %152 = vmatpush1.msra.mxu0 0.0
    %153 = vmatprep.subr.mxu0 0.0
    %154 = vmatpush1.msra.mxu0 0.0
    %155 = vmatprep.subr.mxu0 0.0
    %156 = vmatpush1.msra.mxu0 0.0
    %157 = vmatprep.subr.mxu0 0.0
    %158 = vmatpush1.msra.mxu0 0.0
    %159 = vmatprep.subr.mxu0 0.0
    %160 = vmatpush1.msra.mxu0 0.0
    %161 = vmatprep.subr.mxu0 0.0
    %162 = vmatpush1.msra.mxu0 0.0
    %163 = vmatprep.subr.mxu0 0.0
    %164 = vmatpush1.msra.mxu0 0.0
    %165 = vmatprep.subr.mxu0 0.0
    %166 = vmatpush1.msra.mxu0 0.0
    %167 = vmatprep.subr.mxu0 0.0
    %168 = vmatpush1.msra.mxu0 0.0
    %169 = vmatprep.mubr.f32.mxu0 0.0
    %v170 = vand.u32 %v72, 4294901760
    %v171 = vsub.f32 %v72, %v170
    %v172 = vand.u32 %v171, 4294901760
    %v173 = vsub.f32 %v171, %v172
    %v174 = vand.u32 %v173, 4294901760
    %175 = vmatmul.mubr.f32.gmra.mrb[0].mxu0 %v174
    %v176 = vpop.f32.mrb[0].mxu0
    %v177 = vadd.f32 0.0, %v176
    %v178 = vpop.f32.mrb[0].mxu0
    %179 = vdwg.mxu0
    %180 = vmatprep.subr.mxu0 0.0
    %v181 = vand.u32 %v73, 4294901760
    %v182 = vsub.f32 %v73, %v181
    %v183 = vand.u32 %v182, 4294901760
    %v184 = vsub.f32 %v182, %v183
    %v185 = vand.u32 %v184, 4294901760
    %186 = vmatpush1.msra.mxu0 %v185
    %187 = vmatprep.subr.mxu0 0.0
    %v188 = vand.u32 %v74, 4294901760
    %v189 = vsub.f32 %v74, %v188
    %v190 = vand.u32 %v189, 4294901760
    %v191 = vsub.f32 %v189, %v190
    %v192 = vand.u32 %v191, 4294901760
    %193 = vmatpush1.msra.mxu0 %v192
    %194 = vmatprep.subr.mxu0 0.0
    %v195 = vand.u32 %v75, 4294901760
    %v196 = vsub.f32 %v75, %v195
    %v197 = vand.u32 %v196, 4294901760
    %v198 = vsub.f32 %v196, %v197
    %v199 = vand.u32 %v198, 4294901760
    %200 = vmatpush1.msra.mxu0 %v199
    %201 = vmatprep.subr.mxu0 0.0
    %v202 = vand.u32 %v76, 4294901760
    %v203 = vsub.f32 %v76, %v202
    %v204 = vand.u32 %v203, 4294901760
    %v205 = vsub.f32 %v203, %v204
    %v206 = vand.u32 %v205, 4294901760
    %207 = vmatpush1.msra.mxu0 %v206
    %208 = vmatprep.subr.mxu0 0.0
    %v209 = vand.u32 %v77, 4294901760
    %v210 = vsub.f32 %v77, %v209
    %v211 = vand.u32 %v210, 4294901760
    %v212 = vsub.f32 %v210, %v211
    %v213 = vand.u32 %v212, 4294901760
    %214 = vmatpush1.msra.mxu0 %v213
    %215 = vmatprep.subr.mxu0 0.0
    %v216 = vand.u32 %v78, 4294901760
    %v217 = vsub.f32 %v78, %v216
    %v218 = vand.u32 %v217, 4294901760
    %v219 = vsub.f32 %v217, %v218
    %v220 = vand.u32 %v219, 4294901760
    %221 = vmatpush1.msra.mxu0 %v220
    %222 = vmatprep.subr.mxu0 0.0
    %v223 = vand.u32 %v79, 4294901760
    %v224 = vsub.f32 %v79, %v223
    %v225 = vand.u32 %v224, 4294901760
    %v226 = vsub.f32 %v224, %v225
    %v227 = vand.u32 %v226, 4294901760
    %228 = vmatpush1.msra.mxu0 %v227
    %229 = vmatprep.subr.mxu0 0.0
    %v230 = vand.u32 %v80, 4294901760
    %v231 = vsub.f32 %v80, %v230
    %v232 = vand.u32 %v231, 4294901760
    %v233 = vsub.f32 %v231, %v232
    %v234 = vand.u32 %v233, 4294901760
    %235 = vmatpush1.msra.mxu0 %v234
    %236 = vmatprep.subr.mxu0 0.0
    %v237 = vand.u32 %v81, 4294901760
    %v238 = vsub.f32 %v81, %v237
    %v239 = vand.u32 %v238, 4294901760
    %v240 = vsub.f32 %v238, %v239
    %v241 = vand.u32 %v240, 4294901760
    %242 = vmatpush1.msra.mxu0 %v241
    %243 = vmatprep.subr.mxu0 0.0
    %v244 = vand.u32 %v82, 4294901760
    %v245 = vsub.f32 %v82, %v244
    %v246 = vand.u32 %v245, 4294901760
    %v247 = vsub.f32 %v245, %v246
    %v248 = vand.u32 %v247, 4294901760
    %249 = vmatpush1.msra.mxu0 %v248
    %250 = vmatprep.subr.mxu0 0.0
    %v251 = vand.u32 %v83, 4294901760
    %v252 = vsub.f32 %v83, %v251
    %v253 = vand.u32 %v252, 4294901760
    %v254 = vsub.f32 %v252, %v253
    %v255 = vand.u32 %v254, 4294901760
    %256 = vmatpush1.msra.mxu0 %v255
    %257 = vmatprep.subr.mxu0 0.0
    %v258 = vand.u32 %v84, 4294901760
    %v259 = vsub.f32 %v84, %v258
    %v260 = vand.u32 %v259, 4294901760
    %v261 = vsub.f32 %v259, %v260
    %v262 = vand.u32 %v261, 4294901760
    %263 = vmatpush1.msra.mxu0 %v262
    %264 = vmatprep.subr.mxu0 0.0
    %v265 = vand.u32 %v85, 4294901760
    %v266 = vsub.f32 %v85, %v265
    %v267 = vand.u32 %v266, 4294901760
    %v268 = vsub.f32 %v266, %v267
    %v269 = vand.u32 %v268, 4294901760
    %270 = vmatpush1.msra.mxu0 %v269
    %271 = vmatprep.subr.mxu0 0.0
    %v272 = vand.u32 %v86, 4294901760
    %v273 = vsub.f32 %v86, %v272
    %v274 = vand.u32 %v273, 4294901760
    %v275 = vsub.f32 %v273, %v274
    %v276 = vand.u32 %v275, 4294901760
    %277 = vmatpush1.msra.mxu0 %v276
    %278 = vmatprep.subr.mxu0 0.0
    %v279 = vand.u32 %v87, 4294901760
    %v280 = vsub.f32 %v87, %v279
    %v281 = vand.u32 %v280, 4294901760
    %v282 = vsub.f32 %v280, %v281
    %v283 = vand.u32 %v282, 4294901760
    %284 = vmatpush1.msra.mxu0 %v283
    %285 = vmatprep.subr.mxu0 0.0
    %v286 = vand.u32 %v88, 4294901760
    %v287 = vsub.f32 %v88, %v286
    %v288 = vand.u32 %v287, 4294901760
    %v289 = vsub.f32 %v287, %v288
    %v290 = vand.u32 %v289, 4294901760
    %291 = vmatpush1.msra.mxu0 %v290
    %292 = vmatprep.subr.mxu0 0.0
    %293 = vmatpush1.msra.mxu0 0.0
    %294 = vmatprep.subr.mxu0 0.0
    %295 = vmatpush1.msra.mxu0 0.0
    %296 = vmatprep.subr.mxu0 0.0
    %297 = vmatpush1.msra.mxu0 0.0
    %298 = vmatprep.subr.mxu0 0.0
    %299 = vmatpush1.msra.mxu0 0.0
    %300 = vmatprep.subr.mxu0 0.0
    %301 = vmatpush1.msra.mxu0 0.0
    %302 = vmatprep.subr.mxu0 0.0
    %303 = vmatpush1.msra.mxu0 0.0
    %304 = vmatprep.subr.mxu0 0.0
    %305 = vmatpush1.msra.mxu0 0.0
    %306 = vmatprep.subr.mxu0 0.0
    %307 = vmatpush1.msra.mxu0 0.0
    %308 = vmatprep.subr.mxu0 0.0
    %309 = vmatpush1.msra.mxu0 0.0
    %310 = vmatprep.subr.mxu0 0.0
    %311 = vmatpush1.msra.mxu0 0.0
    %312 = vmatprep.subr.mxu0 0.0
    %313 = vmatpush1.msra.mxu0 0.0
    %314 = vmatprep.subr.mxu0 0.0
    %315 = vmatpush1.msra.mxu0 0.0
    %316 = vmatprep.subr.mxu0 0.0
    %317 = vmatpush1.msra.mxu0 0.0
    %318 = vmatprep.subr.mxu0 0.0
    %319 = vmatpush1.msra.mxu0 0.0
    %320 = vmatprep.subr.mxu0 0.0
    %321 = vmatpush1.msra.mxu0 0.0
    %322 = vmatprep.subr.mxu0 0.0
    %323 = vmatpush1.msra.mxu0 0.0
    %324 = vmatprep.mubr.f32.mxu0 0.0
    %v325 = vand.u32 %v72, 4294901760
    %326 = vmatmul.mubr.f32.gmra.mrb[0].mxu0 %v325
    %v327 = vpop.f32.mrb[0].mxu0
    %v328 = vadd.f32 %v177, %v327
    %v329 = vpop.f32.mrb[0].mxu0
    %330 = vdwg.mxu0
    %331 = vmatprep.subr.mxu0 0.0
    %v332 = vand.u32 %v73, 4294901760
    %v333 = vsub.f32 %v73, %v332
    %334 = vmatpush1.msra.mxu0 %v333
    %335 = vmatprep.subr.mxu0 0.0
    %v336 = vand.u32 %v74, 4294901760
    %v337 = vsub.f32 %v74, %v336
    %338 = vmatpush1.msra.mxu0 %v337
    %339 = vmatprep.subr.mxu0 0.0
    %v340 = vand.u32 %v75, 4294901760
    %v341 = vsub.f32 %v75, %v340
    %342 = vmatpush1.msra.mxu0 %v341
    %343 = vmatprep.subr.mxu0 0.0
    %v344 = vand.u32 %v76, 4294901760
    %v345 = vsub.f32 %v76, %v344
    %346 = vmatpush1.msra.mxu0 %v345
    %347 = vmatprep.subr.mxu0 0.0
    %v348 = vand.u32 %v77, 4294901760
    %v349 = vsub.f32 %v77, %v348
    %350 = vmatpush1.msra.mxu0 %v349
    %351 = vmatprep.subr.mxu0 0.0
    %v352 = vand.u32 %v78, 4294901760
    %v353 = vsub.f32 %v78, %v352
    %354 = vmatpush1.msra.mxu0 %v353
    %355 = vmatprep.subr.mxu0 0.0
    %v356 = vand.u32 %v79, 4294901760
    %v357 = vsub.f32 %v79, %v356
    %358 = vmatpush1.msra.mxu0 %v357
    %359 = vmatprep.subr.mxu0 0.0
    %v360 = vand.u32 %v80, 4294901760
    %v361 = vsub.f32 %v80, %v360
    %362 = vmatpush1.msra.mxu0 %v361
    %363 = vmatprep.subr.mxu0 0.0
    %v364 = vand.u32 %v81, 4294901760
    %v365 = vsub.f32 %v81, %v364
    %366 = vmatpush1.msra.mxu0 %v365
    %367 = vmatprep.subr.mxu0 0.0
    %v368 = vand.u32 %v82, 4294901760
    %v369 = vsub.f32 %v82, %v368
    %370 = vmatpush1.msra.mxu0 %v369
    %371 = vmatprep.subr.mxu0 0.0
    %v372 = vand.u32 %v83, 4294901760
    %v373 = vsub.f32 %v83, %v372
    %374 = vmatpush1.msra.mxu0 %v373
    %375 = vmatprep.subr.mxu0 0.0
    %v376 = vand.u32 %v84, 4294901760
    %v377 = vsub.f32 %v84, %v376
    %378 = vmatpush1.msra.mxu0 %v377
    %379 = vmatprep.subr.mxu0 0.0
    %v380 = vand.u32 %v85, 4294901760
    %v381 = vsub.f32 %v85, %v380
    %382 = vmatpush1.msra.mxu0 %v381
    %383 = vmatprep.subr.mxu0 0.0
    %v384 = vand.u32 %v86, 4294901760
    %v385 = vsub.f32 %v86, %v384
    %386 = vmatpush1.msra.mxu0 %v385
    %387 = vmatprep.subr.mxu0 0.0
    %v388 = vand.u32 %v87, 4294901760
    %v389 = vsub.f32 %v87, %v388
    %390 = vmatpush1.msra.mxu0 %v389
    %391 = vmatprep.subr.mxu0 0.0
    %v392 = vand.u32 %v88, 4294901760
    %v393 = vsub.f32 %v88, %v392
    %394 = vmatpush1.msra.mxu0 %v393
    %395 = vmatprep.subr.mxu0 0.0
    %396 = vmatpush1.msra.mxu0 0.0
    %397 = vmatprep.subr.mxu0 0.0
    %398 = vmatpush1.msra.mxu0 0.0
    %399 = vmatprep.subr.mxu0 0.0
    %400 = vmatpush1.msra.mxu0 0.0
    %401 = vmatprep.subr.mxu0 0.0
    %402 = vmatpush1.msra.mxu0 0.0
    %403 = vmatprep.subr.mxu0 0.0
    %404 = vmatpush1.msra.mxu0 0.0
    %405 = vmatprep.subr.mxu0 0.0
    %406 = vmatpush1.msra.mxu0 0.0
    %407 = vmatprep.subr.mxu0 0.0
    %408 = vmatpush1.msra.mxu0 0.0
    %409 = vmatprep.subr.mxu0 0.0
    %410 = vmatpush1.msra.mxu0 0.0
    %411 = vmatprep.subr.mxu0 0.0
    %412 = vmatpush1.msra.mxu0 0.0
    %413 = vmatprep.subr.mxu0 0.0
    %414 = vmatpush1.msra.mxu0 0.0
    %415 = vmatprep.subr.mxu0 0.0
    %416 = vmatpush1.msra.mxu0 0.0
    %417 = vmatprep.subr.mxu0 0.0
    %418 = vmatpush1.msra.mxu0 0.0
    %419 = vmatprep.subr.mxu0 0.0
    %420 = vmatpush1.msra.mxu0 0.0
    %421 = vmatprep.subr.mxu0 0.0
    %422 = vmatpush1.msra.mxu0 0.0
    %423 = vmatprep.subr.mxu0 0.0
    %424 = vmatpush1.msra.mxu0 0.0
    %425 = vmatprep.subr.mxu0 0.0
    %426 = vmatpush1.msra.mxu0 0.0
    %427 = vmatprep.mubr.f32.mxu0 0.0
    %v428 = vand.u32 %v72, 4294901760
    %v429 = vsub.f32 %v72, %v428
    %430 = vmatmul.mubr.f32.gmra.mrb[0].mxu0 %v429
    %v431 = vpop.f32.mrb[0].mxu0
    %v432 = vadd.f32 %v328, %v431
    %v433 = vpop.f32.mrb[0].mxu0
    %434 = vdwg.mxu0
    %435 = vmatprep.subr.mxu0 0.0
    %v436 = vand.u32 %v73, 4294901760
    %437 = vmatpush1.msra.mxu0 %v436
    %438 = vmatprep.subr.mxu0 0.0
    %v439 = vand.u32 %v74, 4294901760
    %440 = vmatpush1.msra.mxu0 %v439
    %441 = vmatprep.subr.mxu0 0.0
    %v442 = vand.u32 %v75, 4294901760
    %443 = vmatpush1.msra.mxu0 %v442
    %444 = vmatprep.subr.mxu0 0.0
    %v445 = vand.u32 %v76, 4294901760
    %446 = vmatpush1.msra.mxu0 %v445
    %447 = vmatprep.subr.mxu0 0.0
    %v448 = vand.u32 %v77, 4294901760
    %449 = vmatpush1.msra.mxu0 %v448
    %450 = vmatprep.subr.mxu0 0.0
    %v451 = vand.u32 %v78, 4294901760
    %452 = vmatpush1.msra.mxu0 %v451
    %453 = vmatprep.subr.mxu0 0.0
    %v454 = vand.u32 %v79, 4294901760
    %455 = vmatpush1.msra.mxu0 %v454
    %456 = vmatprep.subr.mxu0 0.0
    %v457 = vand.u32 %v80, 4294901760
    %458 = vmatpush1.msra.mxu0 %v457
    %459 = vmatprep.subr.mxu0 0.0
    %v460 = vand.u32 %v81, 4294901760
    %461 = vmatpush1.msra.mxu0 %v460
    %462 = vmatprep.subr.mxu0 0.0
    %v463 = vand.u32 %v82, 4294901760
    %464 = vmatpush1.msra.mxu0 %v463
    %465 = vmatprep.subr.mxu0 0.0
    %v466 = vand.u32 %v83, 4294901760
    %467 = vmatpush1.msra.mxu0 %v466
    %468 = vmatprep.subr.mxu0 0.0
    %v469 = vand.u32 %v84, 4294901760
    %470 = vmatpush1.msra.mxu0 %v469
    %471 = vmatprep.subr.mxu0 0.0
    %v472 = vand.u32 %v85, 4294901760
    %473 = vmatpush1.msra.mxu0 %v472
    %474 = vmatprep.subr.mxu0 0.0
    %v475 = vand.u32 %v86, 4294901760
    %476 = vmatpush1.msra.mxu0 %v475
    %477 = vmatprep.subr.mxu0 0.0
    %v478 = vand.u32 %v87, 4294901760
    %479 = vmatpush1.msra.mxu0 %v478
    %480 = vmatprep.subr.mxu0 0.0
    %v481 = vand.u32 %v88, 4294901760
    %482 = vmatpush1.msra.mxu0 %v481
    %483 = vmatprep.subr.mxu0 0.0
    %484 = vmatpush1.msra.mxu0 0.0
    %485 = vmatprep.subr.mxu0 0.0
    %486 = vmatpush1.msra.mxu0 0.0
    %487 = vmatprep.subr.mxu0 0.0
    %488 = vmatpush1.msra.mxu0 0.0
    %489 = vmatprep.subr.mxu0 0.0
    %490 = vmatpush1.msra.mxu0 0.0
    %491 = vmatprep.subr.mxu0 0.0
    %492 = vmatpush1.msra.mxu0 0.0
    %493 = vmatprep.subr.mxu0 0.0
    %494 = vmatpush1.msra.mxu0 0.0
    %495 = vmatprep.subr.mxu0 0.0
    %496 = vmatpush1.msra.mxu0 0.0
    %497 = vmatprep.subr.mxu0 0.0
    %498 = vmatpush1.msra.mxu0 0.0
    %499 = vmatprep.subr.mxu0 0.0
    %500 = vmatpush1.msra.mxu0 0.0
    %501 = vmatprep.subr.mxu0 0.0
    %502 = vmatpush1.msra.mxu0 0.0
    %503 = vmatprep.subr.mxu0 0.0
    %504 = vmatpush1.msra.mxu0 0.0
    %505 = vmatprep.subr.mxu0 0.0
    %506 = vmatpush1.msra.mxu0 0.0
    %507 = vmatprep.subr.mxu0 0.0
    %508 = vmatpush1.msra.mxu0 0.0
    %509 = vmatprep.subr.mxu0 0.0
    %510 = vmatpush1.msra.mxu0 0.0
    %511 = vmatprep.subr.mxu0 0.0
    %512 = vmatpush1.msra.mxu0 0.0
    %513 = vmatprep.subr.mxu0 0.0
    %514 = vmatpush1.msra.mxu0 0.0
    %515 = vmatprep.mubr.f32.mxu0 0.0
    %v516 = vand.u32 %v72, 4294901760
    %v517 = vsub.f32 %v72, %v516
    %v518 = vand.u32 %v517, 4294901760
    %519 = vmatmul.mubr.f32.gmra.mrb[0].mxu0 %v518
    %v520 = vpop.f32.mrb[0].mxu0
    %v521 = vadd.f32 %v432, %v520
    %v522 = vpop.f32.mrb[0].mxu0
    %523 = vdwg.mxu0
    %524 = vmatprep.subr.mxu0 0.0
    %v525 = vand.u32 %v73, 4294901760
    %v526 = vsub.f32 %v73, %v525
    %v527 = vand.u32 %v526, 4294901760
    %528 = vmatpush1.msra.mxu0 %v527
    %529 = vmatprep.subr.mxu0 0.0
    %v530 = vand.u32 %v74, 4294901760
    %v531 = vsub.f32 %v74, %v530
    %v532 = vand.u32 %v531, 4294901760
    %533 = vmatpush1.msra.mxu0 %v532
    %534 = vmatprep.subr.mxu0 0.0
    %v535 = vand.u32 %v75, 4294901760
    %v536 = vsub.f32 %v75, %v535
    %v537 = vand.u32 %v536, 4294901760
    %538 = vmatpush1.msra.mxu0 %v537
    %539 = vmatprep.subr.mxu0 0.0
    %v540 = vand.u32 %v76, 4294901760
    %v541 = vsub.f32 %v76, %v540
    %v542 = vand.u32 %v541, 4294901760
    %543 = vmatpush1.msra.mxu0 %v542
    %544 = vmatprep.subr.mxu0 0.0
    %v545 = vand.u32 %v77, 4294901760
    %v546 = vsub.f32 %v77, %v545
    %v547 = vand.u32 %v546, 4294901760
    %548 = vmatpush1.msra.mxu0 %v547
    %549 = vmatprep.subr.mxu0 0.0
    %v550 = vand.u32 %v78, 4294901760
    %v551 = vsub.f32 %v78, %v550
    %v552 = vand.u32 %v551, 4294901760
    %553 = vmatpush1.msra.mxu0 %v552
    %554 = vmatprep.subr.mxu0 0.0
    %v555 = vand.u32 %v79, 4294901760
    %v556 = vsub.f32 %v79, %v555
    %v557 = vand.u32 %v556, 4294901760
    %558 = vmatpush1.msra.mxu0 %v557
    %559 = vmatprep.subr.mxu0 0.0
    %v560 = vand.u32 %v80, 4294901760
    %v561 = vsub.f32 %v80, %v560
    %v562 = vand.u32 %v561, 4294901760
    %563 = vmatpush1.msra.mxu0 %v562
    %564 = vmatprep.subr.mxu0 0.0
    %v565 = vand.u32 %v81, 4294901760
    %v566 = vsub.f32 %v81, %v565
    %v567 = vand.u32 %v566, 4294901760
    %568 = vmatpush1.msra.mxu0 %v567
    %569 = vmatprep.subr.mxu0 0.0
    %v570 = vand.u32 %v82, 4294901760
    %v571 = vsub.f32 %v82, %v570
    %v572 = vand.u32 %v571, 4294901760
    %573 = vmatpush1.msra.mxu0 %v572
    %574 = vmatprep.subr.mxu0 0.0
    %v575 = vand.u32 %v83, 4294901760
    %v576 = vsub.f32 %v83, %v575
    %v577 = vand.u32 %v576, 4294901760
    %578 = vmatpush1.msra.mxu0 %v577
    %579 = vmatprep.subr.mxu0 0.0
    %v580 = vand.u32 %v84, 4294901760
    %v581 = vsub.f32 %v84, %v580
    %v582 = vand.u32 %v581, 4294901760
    %583 = vmatpush1.msra.mxu0 %v582
    %584 = vmatprep.subr.mxu0 0.0
    %v585 = vand.u32 %v85, 4294901760
    %v586 = vsub.f32 %v85, %v585
    %v587 = vand.u32 %v586, 4294901760
    %588 = vmatpush1.msra.mxu0 %v587
    %589 = vmatprep.subr.mxu0 0.0
    %v590 = vand.u32 %v86, 4294901760
    %v591 = vsub.f32 %v86, %v590
    %v592 = vand.u32 %v591, 4294901760
    %593 = vmatpush1.msra.mxu0 %v592
    %594 = vmatprep.subr.mxu0 0.0
    %v595 = vand.u32 %v87, 4294901760
    %v596 = vsub.f32 %v87, %v595
    %v597 = vand.u32 %v596, 4294901760
    %598 = vmatpush1.msra.mxu0 %v597
    %599 = vmatprep.subr.mxu0 0.0
    %v600 = vand.u32 %v88, 4294901760
    %v601 = vsub.f32 %v88, %v600
    %v602 = vand.u32 %v601, 4294901760
    %603 = vmatpush1.msra.mxu0 %v602
    %604 = vmatprep.subr.mxu0 0.0
    %605 = vmatpush1.msra.mxu0 0.0
    %606 = vmatprep.subr.mxu0 0.0
    %607 = vmatpush1.msra.mxu0 0.0
    %608 = vmatprep.subr.mxu0 0.0
    %609 = vmatpush1.msra.mxu0 0.0
    %610 = vmatprep.subr.mxu0 0.0
    %611 = vmatpush1.msra.mxu0 0.0
    %612 = vmatprep.subr.mxu0 0.0
    %613 = vmatpush1.msra.mxu0 0.0
    %614 = vmatprep.subr.mxu0 0.0
    %615 = vmatpush1.msra.mxu0 0.0
    %616 = vmatprep.subr.mxu0 0.0
    %617 = vmatpush1.msra.mxu0 0.0
    %618 = vmatprep.subr.mxu0 0.0
    %619 = vmatpush1.msra.mxu0 0.0
    %620 = vmatprep.subr.mxu0 0.0
    %621 = vmatpush1.msra.mxu0 0.0
    %622 = vmatprep.subr.mxu0 0.0
    %623 = vmatpush1.msra.mxu0 0.0
    %624 = vmatprep.subr.mxu0 0.0
    %625 = vmatpush1.msra.mxu0 0.0
    %626 = vmatprep.subr.mxu0 0.0
    %627 = vmatpush1.msra.mxu0 0.0
    %628 = vmatprep.subr.mxu0 0.0
    %629 = vmatpush1.msra.mxu0 0.0
    %630 = vmatprep.subr.mxu0 0.0
    %631 = vmatpush1.msra.mxu0 0.0
    %632 = vmatprep.subr.mxu0 0.0
    %633 = vmatpush1.msra.mxu0 0.0
    %634 = vmatprep.subr.mxu0 0.0
    %635 = vmatpush1.msra.mxu0 0.0
    %636 = vmatprep.mubr.f32.mxu0 0.0
    %v637 = vand.u32 %v72, 4294901760
    %638 = vmatmul.mubr.f32.gmra.mrb[0].mxu0 %v637
    %v639 = vpop.f32.mrb[0].mxu0
    %v640 = vadd.f32 %v521, %v639
    %v641 = vpop.f32.mrb[0].mxu0
    %642 = vdwg.mxu0
    %643 = vmatprep.subr.mxu0 0.0
    %v644 = vand.u32 %v73, 4294901760
    %645 = vmatpush1.msra.mxu0 %v644
    %646 = vmatprep.subr.mxu0 0.0
    %v647 = vand.u32 %v74, 4294901760
    %648 = vmatpush1.msra.mxu0 %v647
    %649 = vmatprep.subr.mxu0 0.0
    %v650 = vand.u32 %v75, 4294901760
    %651 = vmatpush1.msra.mxu0 %v650
    %652 = vmatprep.subr.mxu0 0.0
    %v653 = vand.u32 %v76, 4294901760
    %654 = vmatpush1.msra.mxu0 %v653
    %655 = vmatprep.subr.mxu0 0.0
    %v656 = vand.u32 %v77, 4294901760
    %657 = vmatpush1.msra.mxu0 %v656
    %658 = vmatprep.subr.mxu0 0.0
    %v659 = vand.u32 %v78, 4294901760
    %660 = vmatpush1.msra.mxu0 %v659
    %661 = vmatprep.subr.mxu0 0.0
    %v662 = vand.u32 %v79, 4294901760
    %663 = vmatpush1.msra.mxu0 %v662
    %664 = vmatprep.subr.mxu0 0.0
    %v665 = vand.u32 %v80, 4294901760
    %666 = vmatpush1.msra.mxu0 %v665
    %667 = vmatprep.subr.mxu0 0.0
    %v668 = vand.u32 %v81, 4294901760
    %669 = vmatpush1.msra.mxu0 %v668
    %670 = vmatprep.subr.mxu0 0.0
    %v671 = vand.u32 %v82, 4294901760
    %672 = vmatpush1.msra.mxu0 %v671
    %673 = vmatprep.subr.mxu0 0.0
    %v674 = vand.u32 %v83, 4294901760
    %675 = vmatpush1.msra.mxu0 %v674
    %676 = vmatprep.subr.mxu0 0.0
    %v677 = vand.u32 %v84, 4294901760
    %678 = vmatpush1.msra.mxu0 %v677
    %679 = vmatprep.subr.mxu0 0.0
    %v680 = vand.u32 %v85, 4294901760
    %681 = vmatpush1.msra.mxu0 %v680
    %682 = vmatprep.subr.mxu0 0.0
    %v683 = vand.u32 %v86, 4294901760
    %684 = vmatpush1.msra.mxu0 %v683
    %685 = vmatprep.subr.mxu0 0.0
    %v686 = vand.u32 %v87, 4294901760
    %687 = vmatpush1.msra.mxu0 %v686
    %688 = vmatprep.subr.mxu0 0.0
    %v689 = vand.u32 %v88, 4294901760
    %690 = vmatpush1.msra.mxu0 %v689
    %691 = vmatprep.subr.mxu0 0.0
    %692 = vmatpush1.msra.mxu0 0.0
    %693 = vmatprep.subr.mxu0 0.0
    %694 = vmatpush1.msra.mxu0 0.0
    %695 = vmatprep.subr.mxu0 0.0
    %696 = vmatpush1.msra.mxu0 0.0
    %697 = vmatprep.subr.mxu0 0.0
    %698 = vmatpush1.msra.mxu0 0.0
    %699 = vmatprep.subr.mxu0 0.0
    %700 = vmatpush1.msra.mxu0 0.0
    %701 = vmatprep.subr.mxu0 0.0
    %702 = vmatpush1.msra.mxu0 0.0
    %703 = vmatprep.subr.mxu0 0.0
    %704 = vmatpush1.msra.mxu0 0.0
    %705 = vmatprep.subr.mxu0 0.0
    %706 = vmatpush1.msra.mxu0 0.0
    %707 = vmatprep.subr.mxu0 0.0
    %708 = vmatpush1.msra.mxu0 0.0
    %709 = vmatprep.subr.mxu0 0.0
    %710 = vmatpush1.msra.mxu0 0.0
    %711 = vmatprep.subr.mxu0 0.0
    %712 = vmatpush1.msra.mxu0 0.0
    %713 = vmatprep.subr.mxu0 0.0
    %714 = vmatpush1.msra.mxu0 0.0
    %715 = vmatprep.subr.mxu0 0.0
    %716 = vmatpush1.msra.mxu0 0.0
    %717 = vmatprep.subr.mxu0 0.0
    %718 = vmatpush1.msra.mxu0 0.0
    %719 = vmatprep.subr.mxu0 0.0
    %720 = vmatpush1.msra.mxu0 0.0
    %721 = vmatprep.subr.mxu0 0.0
    %722 = vmatpush1.msra.mxu0 0.0
    %723 = vmatprep.mubr.f32.mxu0 0.0
    %v724 = vand.u32 %v72, 4294901760
    %725 = vmatmul.mubr.f32.gmra.mrb[0].mxu0 %v724
    %v726 = vpop.f32.mrb[0].mxu0
    %v727 = vadd.f32 %v640, %v726
    %v728 = vpop.f32.mrb[0].mxu0
    %729 = vdwg.mxu0
    %v730 = vrsqrt.pop %v727
    %v731 = vmul.f32 %v727, %v730
    %vm732 = vcmp.eq.f32.partialorder %v727, inf
    %v733 = vsel %vm732, %v727, %v731
    %vm734 = vcmp.eq.f32.partialorder %v727, 0.0
    %v735 = vand.u32 %v727, 2147483648
    %v736 = vsel %vm734, %v735, %v733
    %s737 = sadd.s32 0, 0
    %s738 = sadd.s32 %s737, 1
    %p739 = scmp.le.s32.totalorder %s738, 1
    // Predicated region
    $region18: #{tpu_custom_call.1} parent=1 // pred_check
      %p740 = pneg %p739
    $region19: #{tpu_custom_call.1} parent=1 // pred_check_branch
      %742 = sbr.rel (%p740) target = $region21
    $region20: #{tpu_custom_call.1} parent=1 // pred_region
      %v743 = vld [vmem:[#allocation2] sm:$0x1]
      %v744 = vadd.f32 %v743, %v736
      %vm745 = vcmask 253952
      %746 = vst.msk [vmem:[#allocation2] sm:$0x1] %vm745, %v744
    $region21: #{tpu_custom_call.1} parent=1 // pred_fallthru
      _
    %p747 = scmp.gt.s32.totalorder %s738, 1
    // Predicated region
    $region22: #{tpu_custom_call.1} parent=1 // pred_check
      %p748 = pneg %p747
    $region23: #{tpu_custom_call.1} parent=1 // pred_check_branch
      %750 = sbr.rel (%p748) target = $region25
    $region24: #{tpu_custom_call.1} parent=1 // pred_region
      %v751 = vlaneseq
      %v752 = vshrl.u32 %v751, 7
      %v753 = vld [vmem:[#allocation2] sm:$0x1]
      %v754 = vstv %s737
      %v755 = vadd.s32 %v754, %v752
      %vm756 = vcmp.lt.s32.totalorder %v755, 1
      %v757 = vsel %vm756, %v736, 0.0
      %v758 = vadd.f32 %v753, %v757
      %vm759 = vcmask 253952
      %760 = vst.msk [vmem:[#allocation2] sm:$0x1] %vm759, %v758
    $region25: #{tpu_custom_call.1} parent=1 // pred_fallthru
      _
    // Predicated region
    $region26: #{tpu_custom_call.1} parent=1 // pred_check
      %p761 = pneg %p63
    $region27: #{tpu_custom_call.1} parent=1 // pred_check_branch
      %763 = sbr.rel (%p761) target = $region29
    $region28: #{tpu_custom_call.1} parent=1 // pred_region
      %v764 = vld [vmem:[#allocation2] sm:$0x1]
      %v765 = vadd.f32 %v764, 0.0
      %vm766 = vcmask 253952
      %v767 = vsel %vm766, %v765, 0.0
      %768 = vadd.xlane.f32.xlu0 %v767
      %v769 = vpop.xlane.xlu0 %768
      %v770 = vlaneseq
      %v771 = vshrl.u32 %v770, 7
      %v772 = vsub.s32 0, %v771
      %v773 = vrot.slane %v769, %v772
      %774 = vst [vmem:[#allocation3] sm:$0xff] %v773
    $region29: #{tpu_custom_call.1} parent=1 // pred_fallthru
      _
    // Predicated region
    $region30: #{tpu_custom_call.1} parent=1 // pred_check
      _
    $region31: #{tpu_custom_call.1} parent=1 // pred_check_branch
      %776 = sbr.rel (0) target = $region33
    $region32: #{tpu_custom_call.1} parent=1 // pred_region
      %s778 = ssub.s32 128, 128
      %779 = vsyncadd [#allocation4], %s778
      %s781 = sshll.u32 [#allocation3], 4
      %s782 = int_to_ptr.vmem [resolvable:$true] %s781
      %784 = dma.vmem_to_hbm [thread:$0]  %s782, 128, %s3, [#allocation4]
    $region33: #{tpu_custom_call.1} parent=1 // pred_fallthru
      _
    // Predicated region
    $region34: #{tpu_custom_call.1} parent=1 // pred_check
      _
    $region35: #{tpu_custom_call.1} parent=1 // pred_check_branch
      %786 = sbr.rel (0) target = $region37
    $region36: #{tpu_custom_call.1} parent=1 // pred_region
      %787 = dma.done [#allocation4], 128
    $region37: #{tpu_custom_call.1} parent=1 // pred_fallthru
      _
    %788 = vsyncpa [#allocation4], 1

</llo_original>
